<compile_context>
chip_gen: v5e
topology: v5e:2x2
jax: 0.10.0
libtpu: 0.0.40
codegen_flags: <defaults>
</compile_context>

<pallas_src>
import functools

import jax
import jax.numpy as jnp
from jax.experimental import pallas as pl
from jax.experimental.pallas import tpu as pltpu


def lstm_fc_kernel(x_ref, wih_ref, whh_ref, b_ref, wfc_ref, bfc_ref,
                   out_ref, seq_scr):
    # x_ref:   (T, TB, F)  time-major block of the (padded) batch, TB % 8 == 0
    # wih_ref: (F, 4H)  whh_ref: (H, 4H)  b_ref: (1, 4H)   gate order [i, f, o | g]
    # wfc_ref: (T*H, C)  bfc_ref: (1, C)
    # seq_scr: (TB, T*H)  flattened hidden sequence (T-major == PyTorch flatten)
    T, TB, F = x_ref.shape
    H4 = wih_ref.shape[1]
    H = H4 // 4

    # ---- input projection for all timesteps in ONE matmul (hot matmul #1) ----
    # (T*TB, F) @ (F, 4H); the reshape is a no-op on the tiled layout since
    # TB is a multiple of 8.  Bias folded in here (done once, not per step).
    x2 = x_ref[...].reshape(T * TB, F)
    gx = jnp.dot(x2, wih_ref[...], preferred_element_type=jnp.float32) + b_ref[...]

    whh = whh_ref[...]

    h = jnp.zeros((TB, H), jnp.float32)
    c = jnp.zeros((TB, H), jnp.float32)

    # ---- recurrence: fully unrolled (T is static & small) so the scheduler can
    # overlap the tiny MXU / EUP pushes across timesteps ----
    for t in range(T):
        # gates: (TB, 4H) = x-projection[t] + h @ W_hh^T  (hot matmul #2)
        gates = gx[t * TB:(t + 1) * TB] + jnp.dot(
            h, whh, preferred_element_type=jnp.float32)
        sig = jax.nn.sigmoid(gates[:, :3 * H])      # [i | f | o] in one EUP pass
        g_g = jnp.tanh(gates[:, 3 * H:])            # candidate cell in one pass
        i_g = sig[:, 0 * H:1 * H]
        f_g = sig[:, 1 * H:2 * H]
        o_g = sig[:, 2 * H:3 * H]
        c = f_g * c + i_g * g_g
        h = o_g * jnp.tanh(c)
        seq_scr[:, t * H:(t + 1) * H] = h           # static lane slice, T-major

    # ---- fused flatten + fc head: single (TB, T*H) @ (T*H, C) matmul ----
    out_ref[...] = (jnp.dot(seq_scr[...], wfc_ref[...],
                            preferred_element_type=jnp.float32)
                    + bfc_ref[...])


@functools.partial(jax.jit, static_argnames=("tb",))
def lstm_forward(x, wih_t, whh_t, bias, wfc_t, bfc, *, tb=8):
    B, T, F = x.shape
    H4 = wih_t.shape[1]
    H = whh_t.shape[0]
    TH, C = wfc_t.shape

    # Pad batch to a sublane-aligned multiple of the batch tile.
    B_pad = ((B + tb - 1) // tb) * tb
    if B_pad != B:
        x = jnp.pad(x, ((0, B_pad - B), (0, 0), (0, 0)))

    x_tbf = jnp.transpose(x, (1, 0, 2))   # (T, B_pad, F): XLA handles this in HBM

    out = pl.pallas_call(
        lstm_fc_kernel,
        out_shape=jax.ShapeDtypeStruct((B_pad, C), jnp.float32),
        grid_spec=pltpu.PrefetchScalarGridSpec(
            num_scalar_prefetch=0,
            grid=(B_pad // tb,),
            in_specs=[
                pl.BlockSpec((T, tb, F), lambda i: (0, i, 0)),   # x (time-major)
                pl.BlockSpec((F, H4), lambda i: (0, 0)),         # W_ih^T
                pl.BlockSpec((H, H4), lambda i: (0, 0)),         # W_hh^T
                pl.BlockSpec((1, H4), lambda i: (0, 0)),         # combined bias
                pl.BlockSpec((TH, C), lambda i: (0, 0)),         # W_fc^T
                pl.BlockSpec((1, C), lambda i: (0, 0)),          # fc bias
            ],
            out_specs=pl.BlockSpec((tb, C), lambda i: (i, 0)),
            scratch_shapes=[pltpu.VMEM((tb, TH), jnp.float32)],  # seq_scr
        ),
        compiler_params=pltpu.CompilerParams(
            dimension_semantics=("parallel",),       # shard batch across TCs
            vmem_limit_bytes=64 * 1024 * 1024,
        ),
    )(x_tbf, wih_t, whh_t, bias, wfc_t, bfc)
    return out[:B]


def lstm_forward_ref(x, w_ih, w_hh, b_ih, b_hh, w_fc, b_fc):
    """Pure-JAX reference mirroring PyTorch nn.LSTM(batch_first) + flatten + Linear."""
    B, T, F = x.shape
    H = w_hh.shape[1]
    hp = jax.lax.Precision.HIGHEST
    gx = jnp.einsum('btf,gf->btg', x, w_ih, precision=hp) + b_ih + b_hh  # (B,T,4H)

    def step(carry, gx_t):
        h, c = carry
        gates = gx_t + jnp.dot(h, w_hh.T, precision=hp)
        i_g = jax.nn.sigmoid(gates[:, 0 * H:1 * H])
        f_g = jax.nn.sigmoid(gates[:, 1 * H:2 * H])
        g_g = jnp.tanh(gates[:, 2 * H:3 * H])
        o_g = jax.nn.sigmoid(gates[:, 3 * H:4 * H])
        c_new = f_g * c + i_g * g_g
        h_new = o_g * jnp.tanh(c_new)
        return (h_new, c_new), h_new

    (_, _), hs = jax.lax.scan(
        step, (jnp.zeros((B, H)), jnp.zeros((B, H))),
        jnp.transpose(gx, (1, 0, 2)))
    seq = jnp.transpose(hs, (1, 0, 2)).reshape(B, T * H)   # PyTorch flatten order
    return jnp.dot(seq, w_fc.T, precision=hp) + b_fc


if __name__ == "__main__":
    # Small, forward-consistent shapes (module: n_features=12, seq_len, hidden).
    B, T, F, H, C = 2, 8, 12, 32, 5

    key = jax.random.PRNGKey(0)
    k_x, k_wih, k_whh, k_bih, k_bhh, k_wfc, k_bfc = jax.random.split(key, 7)

    scale = 1.0 / jnp.sqrt(H)
    x = jax.random.normal(k_x, (B, T, F), dtype=jnp.float32)

    # PyTorch parameter shapes: weight_ih (4H,F), weight_hh (4H,H), biases (4H,),
    # fc.weight (C, T*H), fc.bias (C,).
    w_ih = jax.random.uniform(k_wih, (4 * H, F), jnp.float32, -scale, scale)
    w_hh = jax.random.uniform(k_whh, (4 * H, H), jnp.float32, -scale, scale)
    b_ih = jax.random.uniform(k_bih, (4 * H,), jnp.float32, -scale, scale)
    b_hh = jax.random.uniform(k_bhh, (4 * H,), jnp.float32, -scale, scale)
    w_fc = jax.random.uniform(k_wfc, (C, T * H), jnp.float32, -scale, scale)
    b_fc = jax.random.uniform(k_bfc, (C,), jnp.float32, -scale, scale)

    # Kernel-side weight prep: transpose, permute gate columns [i,f,g,o]->[i,f,o,g],
    # combine biases, and keep W_fc^T as one flat (T*H, C) matrix.
    perm = jnp.concatenate([jnp.arange(0, H), jnp.arange(H, 2 * H),
                            jnp.arange(3 * H, 4 * H), jnp.arange(2 * H, 3 * H)])
    wih_t = w_ih.T[:, perm]                        # (F, 4H)
    whh_t = w_hh.T[:, perm]                        # (H, 4H)
    bias = (b_ih + b_hh)[perm].reshape(1, 4 * H)   # (1, 4H)
    wfc_t = w_fc.T                                 # (T*H, C)
    bfc = b_fc.reshape(1, C)                       # (1, C)

    out = lstm_forward(x, wih_t, whh_t, bias, wfc_t, bfc)
    out = jax.block_until_ready(out)

    ref = lstm_forward_ref(x, w_ih, w_hh, b_ih, b_hh, w_fc, b_fc)
    assert out.shape == (B, C), out.shape
    assert jnp.allclose(out, ref, atol=1e-4, rtol=1e-4), (out, ref)

    print("KERNEL_OK")
</pallas_src>

<mosaic_0001>
module attributes {stable_mosaic.version = 11 : i64} {
  func.func @lstm_fc_kernel(%arg0: i32, %arg1: memref<8x8x12xf32, #tpu.memory_space<vmem>>, %arg2: memref<12x128xf32, #tpu.memory_space<vmem>>, %arg3: memref<32x128xf32, #tpu.memory_space<vmem>>, %arg4: memref<1x128xf32, #tpu.memory_space<vmem>>, %arg5: memref<256x5xf32, #tpu.memory_space<vmem>>, %arg6: memref<1x5xf32, #tpu.memory_space<vmem>>, %arg7: memref<8x5xf32, #tpu.memory_space<vmem>>, %arg8: memref<8x256xf32, #tpu.memory_space<vmem>>) attributes {dimension_semantics = [#tpu.dimension_semantics<parallel>], iteration_bounds = array<i64: 1>, scalar_prefetch = 0 : i64, scratch_operands = 1 : i64, tpu.core_type = #tpu.core_type<tc>, window_params = [{transform_indices = @transform_0, window_bounds = array<i64: 8, 8, 12>}, {pipeline_mode = #tpu.pipeline_mode<synchronous>, transform_indices = @transform_1, window_bounds = array<i64: 12, 128>}, {pipeline_mode = #tpu.pipeline_mode<synchronous>, transform_indices = @transform_2, window_bounds = array<i64: 32, 128>}, {pipeline_mode = #tpu.pipeline_mode<synchronous>, transform_indices = @transform_3, window_bounds = array<i64: 1, 128>}, {pipeline_mode = #tpu.pipeline_mode<synchronous>, transform_indices = @transform_4, window_bounds = array<i64: 256, 5>}, {pipeline_mode = #tpu.pipeline_mode<synchronous>, transform_indices = @transform_5, window_bounds = array<i64: 1, 5>}, {transform_indices = @transform_6, window_bounds = array<i64: 8, 5>}]} {
    %c0 = arith.constant 0 : index
    %c0_0 = arith.constant 0 : index
    %c0_1 = arith.constant 0 : index
    %0 = vector.load %arg1[%c0, %c0_0, %c0_1] : memref<8x8x12xf32, #tpu.memory_space<vmem>>, vector<8x8x12xf32>
    %1 = vector.shape_cast %0 : vector<8x8x12xf32> to vector<64x12xf32>
    %c0_2 = arith.constant 0 : index
    %c0_3 = arith.constant 0 : index
    %2 = vector.load %arg2[%c0_2, %c0_3] : memref<12x128xf32, #tpu.memory_space<vmem>>, vector<12x128xf32>
    %cst = arith.constant dense<0.000000e+00> : vector<64x128xf32>
    %3 = tpu.matmul %1, %2, %cst {dimension_numbers = #tpu.dot_dimension_numbers<[1], [0], [0], [1], [0, 0, 1, 1], [], []>} : vector<64x12xf32>, vector<12x128xf32>, vector<64x128xf32> -> vector<64x128xf32>
    %c0_4 = arith.constant 0 : index
    %c0_5 = arith.constant 0 : index
    %4 = vector.load %arg4[%c0_4, %c0_5] : memref<1x128xf32, #tpu.memory_space<vmem>>, vector<1x128xf32>
    %5 = vector.broadcast %4 : vector<1x128xf32> to vector<64x128xf32>
    %6 = arith.addf %3, %5 : vector<64x128xf32>
    %c0_6 = arith.constant 0 : index
    %c0_7 = arith.constant 0 : index
    %7 = vector.load %arg3[%c0_6, %c0_7] : memref<32x128xf32, #tpu.memory_space<vmem>>, vector<32x128xf32>
    %cst_8 = arith.constant 0.000000e+00 : f32
    %8 = vector.broadcast %cst_8 : f32 to vector<8x32xf32>
    %cst_9 = arith.constant 0.000000e+00 : f32
    %9 = vector.broadcast %cst_9 : f32 to vector<8x32xf32>
    %10 = vector.extract_strided_slice %6 {offsets = [0, 0], sizes = [8, 128], strides = [1, 1]} : vector<64x128xf32> to vector<8x128xf32>
    %cst_10 = arith.constant dense<0.000000e+00> : vector<8x128xf32>
    %11 = tpu.matmul %8, %7, %cst_10 {dimension_numbers = #tpu.dot_dimension_numbers<[1], [0], [0], [1], [0, 0, 1, 1], [], []>} : vector<8x32xf32>, vector<32x128xf32>, vector<8x128xf32> -> vector<8x128xf32>
    %12 = arith.addf %10, %11 : vector<8x128xf32>
    %13 = vector.extract_strided_slice %12 {offsets = [0, 0], sizes = [8, 96], strides = [1, 1]} : vector<8x128xf32> to vector<8x96xf32>
    %14 = arith.negf %13 : vector<8x96xf32>
    %15 = math.exp %14 : vector<8x96xf32>
    %cst_11 = arith.constant 1.000000e+00 : f32
    %16 = vector.broadcast %cst_11 : f32 to vector<8x96xf32>
    %17 = arith.addf %16, %15 : vector<8x96xf32>
    %18 = arith.divf %16, %17 : vector<8x96xf32>
    %19 = vector.extract_strided_slice %12 {offsets = [0, 96], sizes = [8, 32], strides = [1, 1]} : vector<8x128xf32> to vector<8x32xf32>
    %20 = math.tanh %19 : vector<8x32xf32>
    %21 = vector.extract_strided_slice %18 {offsets = [0, 0], sizes = [8, 32], strides = [1, 1]} : vector<8x96xf32> to vector<8x32xf32>
    %22 = vector.extract_strided_slice %18 {offsets = [0, 32], sizes = [8, 32], strides = [1, 1]} : vector<8x96xf32> to vector<8x32xf32>
    %23 = vector.extract_strided_slice %18 {offsets = [0, 64], sizes = [8, 32], strides = [1, 1]} : vector<8x96xf32> to vector<8x32xf32>
    %24 = arith.mulf %22, %9 : vector<8x32xf32>
    %25 = arith.mulf %21, %20 : vector<8x32xf32>
    %26 = arith.addf %24, %25 : vector<8x32xf32>
    %27 = math.tanh %26 : vector<8x32xf32>
    %28 = arith.mulf %23, %27 : vector<8x32xf32>
    %c0_12 = arith.constant 0 : index
    %c0_13 = arith.constant 0 : index
    %29 = vector.load %arg8[%c0_12, %c0_13] : memref<8x256xf32, #tpu.memory_space<vmem>>, vector<8x32xf32>
    tpu.vector_store %arg8[%c0_12, %c0_13], %28 {strides = array<i32>} : memref<8x256xf32, #tpu.memory_space<vmem>>, vector<8x32xf32>,
    %30 = vector.extract_strided_slice %6 {offsets = [8, 0], sizes = [8, 128], strides = [1, 1]} : vector<64x128xf32> to vector<8x128xf32>
    %cst_14 = arith.constant dense<0.000000e+00> : vector<8x128xf32>
    %31 = tpu.matmul %28, %7, %cst_14 {dimension_numbers = #tpu.dot_dimension_numbers<[1], [0], [0], [1], [0, 0, 1, 1], [], []>} : vector<8x32xf32>, vector<32x128xf32>, vector<8x128xf32> -> vector<8x128xf32>
    %32 = arith.addf %30, %31 : vector<8x128xf32>
    %33 = vector.extract_strided_slice %32 {offsets = [0, 0], sizes = [8, 96], strides = [1, 1]} : vector<8x128xf32> to vector<8x96xf32>
    %34 = arith.negf %33 : vector<8x96xf32>
    %35 = math.exp %34 : vector<8x96xf32>
    %cst_15 = arith.constant 1.000000e+00 : f32
    %36 = vector.broadcast %cst_15 : f32 to vector<8x96xf32>
    %37 = arith.addf %36, %35 : vector<8x96xf32>
    %38 = arith.divf %36, %37 : vector<8x96xf32>
    %39 = vector.extract_strided_slice %32 {offsets = [0, 96], sizes = [8, 32], strides = [1, 1]} : vector<8x128xf32> to vector<8x32xf32>
    %40 = math.tanh %39 : vector<8x32xf32>
    %41 = vector.extract_strided_slice %38 {offsets = [0, 0], sizes = [8, 32], strides = [1, 1]} : vector<8x96xf32> to vector<8x32xf32>
    %42 = vector.extract_strided_slice %38 {offsets = [0, 32], sizes = [8, 32], strides = [1, 1]} : vector<8x96xf32> to vector<8x32xf32>
    %43 = vector.extract_strided_slice %38 {offsets = [0, 64], sizes = [8, 32], strides = [1, 1]} : vector<8x96xf32> to vector<8x32xf32>
    %44 = arith.mulf %42, %26 : vector<8x32xf32>
    %45 = arith.mulf %41, %40 : vector<8x32xf32>
    %46 = arith.addf %44, %45 : vector<8x32xf32>
    %47 = math.tanh %46 : vector<8x32xf32>
    %48 = arith.mulf %43, %47 : vector<8x32xf32>
    %c0_16 = arith.constant 0 : index
    %c32 = arith.constant 32 : index
    %49 = vector.load %arg8[%c0_16, %c32] : memref<8x256xf32, #tpu.memory_space<vmem>>, vector<8x32xf32>
    tpu.vector_store %arg8[%c0_16, %c32], %48 {strides = array<i32>} : memref<8x256xf32, #tpu.memory_space<vmem>>, vector<8x32xf32>,
    %50 = vector.extract_strided_slice %6 {offsets = [16, 0], sizes = [8, 128], strides = [1, 1]} : vector<64x128xf32> to vector<8x128xf32>
    %cst_17 = arith.constant dense<0.000000e+00> : vector<8x128xf32>
    %51 = tpu.matmul %48, %7, %cst_17 {dimension_numbers = #tpu.dot_dimension_numbers<[1], [0], [0], [1], [0, 0, 1, 1], [], []>} : vector<8x32xf32>, vector<32x128xf32>, vector<8x128xf32> -> vector<8x128xf32>
    %52 = arith.addf %50, %51 : vector<8x128xf32>
    %53 = vector.extract_strided_slice %52 {offsets = [0, 0], sizes = [8, 96], strides = [1, 1]} : vector<8x128xf32> to vector<8x96xf32>
    %54 = arith.negf %53 : vector<8x96xf32>
    %55 = math.exp %54 : vector<8x96xf32>
    %cst_18 = arith.constant 1.000000e+00 : f32
    %56 = vector.broadcast %cst_18 : f32 to vector<8x96xf32>
    %57 = arith.addf %56, %55 : vector<8x96xf32>
    %58 = arith.divf %56, %57 : vector<8x96xf32>
    %59 = vector.extract_strided_slice %52 {offsets = [0, 96], sizes = [8, 32], strides = [1, 1]} : vector<8x128xf32> to vector<8x32xf32>
    %60 = math.tanh %59 : vector<8x32xf32>
    %61 = vector.extract_strided_slice %58 {offsets = [0, 0], sizes = [8, 32], strides = [1, 1]} : vector<8x96xf32> to vector<8x32xf32>
    %62 = vector.extract_strided_slice %58 {offsets = [0, 32], sizes = [8, 32], strides = [1, 1]} : vector<8x96xf32> to vector<8x32xf32>
    %63 = vector.extract_strided_slice %58 {offsets = [0, 64], sizes = [8, 32], strides = [1, 1]} : vector<8x96xf32> to vector<8x32xf32>
    %64 = arith.mulf %62, %46 : vector<8x32xf32>
    %65 = arith.mulf %61, %60 : vector<8x32xf32>
    %66 = arith.addf %64, %65 : vector<8x32xf32>
    %67 = math.tanh %66 : vector<8x32xf32>
    %68 = arith.mulf %63, %67 : vector<8x32xf32>
    %c0_19 = arith.constant 0 : index
    %c64 = arith.constant 64 : index
    %69 = vector.load %arg8[%c0_19, %c64] : memref<8x256xf32, #tpu.memory_space<vmem>>, vector<8x32xf32>
    tpu.vector_store %arg8[%c0_19, %c64], %68 {strides = array<i32>} : memref<8x256xf32, #tpu.memory_space<vmem>>, vector<8x32xf32>,
    %70 = vector.extract_strided_slice %6 {offsets = [24, 0], sizes = [8, 128], strides = [1, 1]} : vector<64x128xf32> to vector<8x128xf32>
    %cst_20 = arith.constant dense<0.000000e+00> : vector<8x128xf32>
    %71 = tpu.matmul %68, %7, %cst_20 {dimension_numbers = #tpu.dot_dimension_numbers<[1], [0], [0], [1], [0, 0, 1, 1], [], []>} : vector<8x32xf32>, vector<32x128xf32>, vector<8x128xf32> -> vector<8x128xf32>
    %72 = arith.addf %70, %71 : vector<8x128xf32>
    %73 = vector.extract_strided_slice %72 {offsets = [0, 0], sizes = [8, 96], strides = [1, 1]} : vector<8x128xf32> to vector<8x96xf32>
    %74 = arith.negf %73 : vector<8x96xf32>
    %75 = math.exp %74 : vector<8x96xf32>
    %cst_21 = arith.constant 1.000000e+00 : f32
    %76 = vector.broadcast %cst_21 : f32 to vector<8x96xf32>
    %77 = arith.addf %76, %75 : vector<8x96xf32>
    %78 = arith.divf %76, %77 : vector<8x96xf32>
    %79 = vector.extract_strided_slice %72 {offsets = [0, 96], sizes = [8, 32], strides = [1, 1]} : vector<8x128xf32> to vector<8x32xf32>
    %80 = math.tanh %79 : vector<8x32xf32>
    %81 = vector.extract_strided_slice %78 {offsets = [0, 0], sizes = [8, 32], strides = [1, 1]} : vector<8x96xf32> to vector<8x32xf32>
    %82 = vector.extract_strided_slice %78 {offsets = [0, 32], sizes = [8, 32], strides = [1, 1]} : vector<8x96xf32> to vector<8x32xf32>
    %83 = vector.extract_strided_slice %78 {offsets = [0, 64], sizes = [8, 32], strides = [1, 1]} : vector<8x96xf32> to vector<8x32xf32>
    %84 = arith.mulf %82, %66 : vector<8x32xf32>
    %85 = arith.mulf %81, %80 : vector<8x32xf32>
    %86 = arith.addf %84, %85 : vector<8x32xf32>
    %87 = math.tanh %86 : vector<8x32xf32>
    %88 = arith.mulf %83, %87 : vector<8x32xf32>
    %c0_22 = arith.constant 0 : index
    %c96 = arith.constant 96 : index
    %89 = vector.load %arg8[%c0_22, %c96] : memref<8x256xf32, #tpu.memory_space<vmem>>, vector<8x32xf32>
    tpu.vector_store %arg8[%c0_22, %c96], %88 {strides = array<i32>} : memref<8x256xf32, #tpu.memory_space<vmem>>, vector<8x32xf32>,
    %90 = vector.extract_strided_slice %6 {offsets = [32, 0], sizes = [8, 128], strides = [1, 1]} : vector<64x128xf32> to vector<8x128xf32>
    %cst_23 = arith.constant dense<0.000000e+00> : vector<8x128xf32>
    %91 = tpu.matmul %88, %7, %cst_23 {dimension_numbers = #tpu.dot_dimension_numbers<[1], [0], [0], [1], [0, 0, 1, 1], [], []>} : vector<8x32xf32>, vector<32x128xf32>, vector<8x128xf32> -> vector<8x128xf32>
    %92 = arith.addf %90, %91 : vector<8x128xf32>
    %93 = vector.extract_strided_slice %92 {offsets = [0, 0], sizes = [8, 96], strides = [1, 1]} : vector<8x128xf32> to vector<8x96xf32>
    %94 = arith.negf %93 : vector<8x96xf32>
    %95 = math.exp %94 : vector<8x96xf32>
    %cst_24 = arith.constant 1.000000e+00 : f32
    %96 = vector.broadcast %cst_24 : f32 to vector<8x96xf32>
    %97 = arith.addf %96, %95 : vector<8x96xf32>
    %98 = arith.divf %96, %97 : vector<8x96xf32>
    %99 = vector.extract_strided_slice %92 {offsets = [0, 96], sizes = [8, 32], strides = [1, 1]} : vector<8x128xf32> to vector<8x32xf32>
    %100 = math.tanh %99 : vector<8x32xf32>
    %101 = vector.extract_strided_slice %98 {offsets = [0, 0], sizes = [8, 32], strides = [1, 1]} : vector<8x96xf32> to vector<8x32xf32>
    %102 = vector.extract_strided_slice %98 {offsets = [0, 32], sizes = [8, 32], strides = [1, 1]} : vector<8x96xf32> to vector<8x32xf32>
    %103 = vector.extract_strided_slice %98 {offsets = [0, 64], sizes = [8, 32], strides = [1, 1]} : vector<8x96xf32> to vector<8x32xf32>
    %104 = arith.mulf %102, %86 : vector<8x32xf32>
    %105 = arith.mulf %101, %100 : vector<8x32xf32>
    %106 = arith.addf %104, %105 : vector<8x32xf32>
    %107 = math.tanh %106 : vector<8x32xf32>
    %108 = arith.mulf %103, %107 : vector<8x32xf32>
    %c0_25 = arith.constant 0 : index
    %c128 = arith.constant 128 : index
    %109 = vector.load %arg8[%c0_25, %c128] : memref<8x256xf32, #tpu.memory_space<vmem>>, vector<8x32xf32>
    tpu.vector_store %arg8[%c0_25, %c128], %108 {strides = array<i32>} : memref<8x256xf32, #tpu.memory_space<vmem>>, vector<8x32xf32>,
    %110 = vector.extract_strided_slice %6 {offsets = [40, 0], sizes = [8, 128], strides = [1, 1]} : vector<64x128xf32> to vector<8x128xf32>
    %cst_26 = arith.constant dense<0.000000e+00> : vector<8x128xf32>
    %111 = tpu.matmul %108, %7, %cst_26 {dimension_numbers = #tpu.dot_dimension_numbers<[1], [0], [0], [1], [0, 0, 1, 1], [], []>} : vector<8x32xf32>, vector<32x128xf32>, vector<8x128xf32> -> vector<8x128xf32>
    %112 = arith.addf %110, %111 : vector<8x128xf32>
    %113 = vector.extract_strided_slice %112 {offsets = [0, 0], sizes = [8, 96], strides = [1, 1]} : vector<8x128xf32> to vector<8x96xf32>
    %114 = arith.negf %113 : vector<8x96xf32>
    %115 = math.exp %114 : vector<8x96xf32>
    %cst_27 = arith.constant 1.000000e+00 : f32
    %116 = vector.broadcast %cst_27 : f32 to vector<8x96xf32>
    %117 = arith.addf %116, %115 : vector<8x96xf32>
    %118 = arith.divf %116, %117 : vector<8x96xf32>
    %119 = vector.extract_strided_slice %112 {offsets = [0, 96], sizes = [8, 32], strides = [1, 1]} : vector<8x128xf32> to vector<8x32xf32>
    %120 = math.tanh %119 : vector<8x32xf32>
    %121 = vector.extract_strided_slice %118 {offsets = [0, 0], sizes = [8, 32], strides = [1, 1]} : vector<8x96xf32> to vector<8x32xf32>
    %122 = vector.extract_strided_slice %118 {offsets = [0, 32], sizes = [8, 32], strides = [1, 1]} : vector<8x96xf32> to vector<8x32xf32>
    %123 = vector.extract_strided_slice %118 {offsets = [0, 64], sizes = [8, 32], strides = [1, 1]} : vector<8x96xf32> to vector<8x32xf32>
    %124 = arith.mulf %122, %106 : vector<8x32xf32>
    %125 = arith.mulf %121, %120 : vector<8x32xf32>
    %126 = arith.addf %124, %125 : vector<8x32xf32>
    %127 = math.tanh %126 : vector<8x32xf32>
    %128 = arith.mulf %123, %127 : vector<8x32xf32>
    %c0_28 = arith.constant 0 : index
    %c160 = arith.constant 160 : index
    %129 = vector.load %arg8[%c0_28, %c160] : memref<8x256xf32, #tpu.memory_space<vmem>>, vector<8x32xf32>
    tpu.vector_store %arg8[%c0_28, %c160], %128 {strides = array<i32>} : memref<8x256xf32, #tpu.memory_space<vmem>>, vector<8x32xf32>,
    %130 = vector.extract_strided_slice %6 {offsets = [48, 0], sizes = [8, 128], strides = [1, 1]} : vector<64x128xf32> to vector<8x128xf32>
    %cst_29 = arith.constant dense<0.000000e+00> : vector<8x128xf32>
    %131 = tpu.matmul %128, %7, %cst_29 {dimension_numbers = #tpu.dot_dimension_numbers<[1], [0], [0], [1], [0, 0, 1, 1], [], []>} : vector<8x32xf32>, vector<32x128xf32>, vector<8x128xf32> -> vector<8x128xf32>
    %132 = arith.addf %130, %131 : vector<8x128xf32>
    %133 = vector.extract_strided_slice %132 {offsets = [0, 0], sizes = [8, 96], strides = [1, 1]} : vector<8x128xf32> to vector<8x96xf32>
    %134 = arith.negf %133 : vector<8x96xf32>
    %135 = math.exp %134 : vector<8x96xf32>
    %cst_30 = arith.constant 1.000000e+00 : f32
    %136 = vector.broadcast %cst_30 : f32 to vector<8x96xf32>
    %137 = arith.addf %136, %135 : vector<8x96xf32>
    %138 = arith.divf %136, %137 : vector<8x96xf32>
    %139 = vector.extract_strided_slice %132 {offsets = [0, 96], sizes = [8, 32], strides = [1, 1]} : vector<8x128xf32> to vector<8x32xf32>
    %140 = math.tanh %139 : vector<8x32xf32>
    %141 = vector.extract_strided_slice %138 {offsets = [0, 0], sizes = [8, 32], strides = [1, 1]} : vector<8x96xf32> to vector<8x32xf32>
    %142 = vector.extract_strided_slice %138 {offsets = [0, 32], sizes = [8, 32], strides = [1, 1]} : vector<8x96xf32> to vector<8x32xf32>
    %143 = vector.extract_strided_slice %138 {offsets = [0, 64], sizes = [8, 32], strides = [1, 1]} : vector<8x96xf32> to vector<8x32xf32>
    %144 = arith.mulf %142, %126 : vector<8x32xf32>
    %145 = arith.mulf %141, %140 : vector<8x32xf32>
    %146 = arith.addf %144, %145 : vector<8x32xf32>
    %147 = math.tanh %146 : vector<8x32xf32>
    %148 = arith.mulf %143, %147 : vector<8x32xf32>
    %c0_31 = arith.constant 0 : index
    %c192 = arith.constant 192 : index
    %149 = vector.load %arg8[%c0_31, %c192] : memref<8x256xf32, #tpu.memory_space<vmem>>, vector<8x32xf32>
    tpu.vector_store %arg8[%c0_31, %c192], %148 {strides = array<i32>} : memref<8x256xf32, #tpu.memory_space<vmem>>, vector<8x32xf32>,
    %150 = vector.extract_strided_slice %6 {offsets = [56, 0], sizes = [8, 128], strides = [1, 1]} : vector<64x128xf32> to vector<8x128xf32>
    %cst_32 = arith.constant dense<0.000000e+00> : vector<8x128xf32>
    %151 = tpu.matmul %148, %7, %cst_32 {dimension_numbers = #tpu.dot_dimension_numbers<[1], [0], [0], [1], [0, 0, 1, 1], [], []>} : vector<8x32xf32>, vector<32x128xf32>, vector<8x128xf32> -> vector<8x128xf32>
    %152 = arith.addf %150, %151 : vector<8x128xf32>
    %153 = vector.extract_strided_slice %152 {offsets = [0, 0], sizes = [8, 96], strides = [1, 1]} : vector<8x128xf32> to vector<8x96xf32>
    %154 = arith.negf %153 : vector<8x96xf32>
    %155 = math.exp %154 : vector<8x96xf32>
    %cst_33 = arith.constant 1.000000e+00 : f32
    %156 = vector.broadcast %cst_33 : f32 to vector<8x96xf32>
    %157 = arith.addf %156, %155 : vector<8x96xf32>
    %158 = arith.divf %156, %157 : vector<8x96xf32>
    %159 = vector.extract_strided_slice %152 {offsets = [0, 96], sizes = [8, 32], strides = [1, 1]} : vector<8x128xf32> to vector<8x32xf32>
    %160 = math.tanh %159 : vector<8x32xf32>
    %161 = vector.extract_strided_slice %158 {offsets = [0, 0], sizes = [8, 32], strides = [1, 1]} : vector<8x96xf32> to vector<8x32xf32>
    %162 = vector.extract_strided_slice %158 {offsets = [0, 32], sizes = [8, 32], strides = [1, 1]} : vector<8x96xf32> to vector<8x32xf32>
    %163 = vector.extract_strided_slice %158 {offsets = [0, 64], sizes = [8, 32], strides = [1, 1]} : vector<8x96xf32> to vector<8x32xf32>
    %164 = arith.mulf %162, %146 : vector<8x32xf32>
    %165 = arith.mulf %161, %160 : vector<8x32xf32>
    %166 = arith.addf %164, %165 : vector<8x32xf32>
    %167 = math.tanh %166 : vector<8x32xf32>
    %168 = arith.mulf %163, %167 : vector<8x32xf32>
    %c0_34 = arith.constant 0 : index
    %c224 = arith.constant 224 : index
    %169 = vector.load %arg8[%c0_34, %c224] : memref<8x256xf32, #tpu.memory_space<vmem>>, vector<8x32xf32>
    tpu.vector_store %arg8[%c0_34, %c224], %168 {strides = array<i32>} : memref<8x256xf32, #tpu.memory_space<vmem>>, vector<8x32xf32>,
    %c0_35 = arith.constant 0 : index
    %c0_36 = arith.constant 0 : index
    %170 = vector.load %arg8[%c0_35, %c0_36] : memref<8x256xf32, #tpu.memory_space<vmem>>, vector<8x256xf32>
    %c0_37 = arith.constant 0 : index
    %c0_38 = arith.constant 0 : index
    %171 = vector.load %arg5[%c0_37, %c0_38] : memref<256x5xf32, #tpu.memory_space<vmem>>, vector<256x5xf32>
    %cst_39 = arith.constant dense<0.000000e+00> : vector<8x5xf32>
    %172 = tpu.matmul %170, %171, %cst_39 {dimension_numbers = #tpu.dot_dimension_numbers<[1], [0], [0], [1], [0, 0, 1, 1], [], []>} : vector<8x256xf32>, vector<256x5xf32>, vector<8x5xf32> -> vector<8x5xf32>
    %c0_40 = arith.constant 0 : index
    %c0_41 = arith.constant 0 : index
    %173 = vector.load %arg6[%c0_40, %c0_41] : memref<1x5xf32, #tpu.memory_space<vmem>>, vector<1x5xf32>
    %174 = vector.broadcast %173 : vector<1x5xf32> to vector<8x5xf32>
    %175 = arith.addf %172, %174 : vector<8x5xf32>
    %c0_42 = arith.constant 0 : index
    %c0_43 = arith.constant 0 : index
    %176 = vector.load %arg7[%c0_42, %c0_43] : memref<8x5xf32, #tpu.memory_space<vmem>>, vector<8x5xf32>
    tpu.vector_store %arg7[%c0_42, %c0_43], %175 {strides = array<i32>} : memref<8x5xf32, #tpu.memory_space<vmem>>, vector<8x5xf32>,
    return
  }
  func.func @transform_0(%arg0: i32) -> (i32, i32, i32) {
    %c0_i32 = arith.constant 0 : i32
    %c0_i32_0 = arith.constant 0 : i32
    %c0_i32_1 = arith.constant 0 : i32
    return %c0_i32, %arg0, %c0_i32_0 : i32, i32, i32
  }
  func.func @transform_1(%arg0: i32) -> (i32, i32) {
    %c0_i32 = arith.constant 0 : i32
    %c0_i32_0 = arith.constant 0 : i32
    %c0_i32_1 = arith.constant 0 : i32
    return %c0_i32, %c0_i32_0 : i32, i32
  }
  func.func @transform_2(%arg0: i32) -> (i32, i32) {
    %c0_i32 = arith.constant 0 : i32
    %c0_i32_0 = arith.constant 0 : i32
    %c0_i32_1 = arith.constant 0 : i32
    return %c0_i32, %c0_i32_0 : i32, i32
  }
  func.func @transform_3(%arg0: i32) -> (i32, i32) {
    %c0_i32 = arith.constant 0 : i32
    %c0_i32_0 = arith.constant 0 : i32
    %c0_i32_1 = arith.constant 0 : i32
    return %c0_i32, %c0_i32_0 : i32, i32
  }
  func.func @transform_4(%arg0: i32) -> (i32, i32) {
    %c0_i32 = arith.constant 0 : i32
    %c0_i32_0 = arith.constant 0 : i32
    %c0_i32_1 = arith.constant 0 : i32
    return %c0_i32, %c0_i32_0 : i32, i32
  }
  func.func @transform_5(%arg0: i32) -> (i32, i32) {
    %c0_i32 = arith.constant 0 : i32
    %c0_i32_0 = arith.constant 0 : i32
    %c0_i32_1 = arith.constant 0 : i32
    return %c0_i32, %c0_i32_0 : i32, i32
  }
  func.func @transform_6(%arg0: i32) -> (i32, i32) {
    %c0_i32 = arith.constant 0 : i32
    %c0_i32_0 = arith.constant 0 : i32
    return %arg0, %c0_i32 : i32, i32
  }
}

</mosaic_0001>

<llo_original>
// kernel: lstm_forward.1
$region0: #{lstm_forward.1}
  #allocation0 [shape = 'u32[]', space=smem, size = 0x4, offset = 0x4, fixed_abs, tag = 'smem constant byte address 0x4 - core index']
  #allocation1 [shape = 'u32[72,128]{1,0:T(1,128)}', space=vmem, size = 0x9000, scoped, tag = 'internal scratch']
  #allocation2 [shape = 'f32[8,256]{1,0:T(8,128)}', space=vmem, size = 0x2000, scoped, tag = 'scratch operand']
  %s0 = inlined_call_operand.vmem [shape: f32[8,8,12], index: 0, kind: input, shape index: {}]
  %s1 = inlined_call_operand.vmem [shape: f32[12,128], index: 1, kind: input, shape index: {}]
  %s2 = inlined_call_operand.vmem [shape: f32[32,128], index: 2, kind: input, shape index: {}]
  %s3 = inlined_call_operand.vmem [shape: f32[1,128], index: 3, kind: input, shape index: {}]
  %s4 = inlined_call_operand.vmem [shape: f32[256,5], index: 4, kind: input, shape index: {}]
  %s5 = inlined_call_operand.vmem [shape: f32[1,5], index: 5, kind: input, shape index: {}]
  %s6 = inlined_call_operand.vmem [shape: f32[8,5], index: 6, kind: output, shape index: {}]
  %s7 = sld [smem:[#allocation0]]
  $region34: #{lstm_forward.1} parent=0
    _
  %s9 = ssub.s32 1, %s7
  %s10 = scalar_select 0, %s9, %s7
  // Predicated region
  $region2: #{lstm_forward.1} parent=0 // pred_check
    _
  $region3: #{lstm_forward.1} parent=0 // pred_check_branch
    %12 = sbr.rel (0) target = $region5
  $region4: #{lstm_forward.1} parent=0 // pred_region
    _
  $region5: #{lstm_forward.1} parent=0 // pred_fallthru
    _
  // Predicated region
  $region6: #{lstm_forward.1} parent=0 // pred_check
    _
  $region7: #{lstm_forward.1} parent=0 // pred_check_branch
    %14 = sbr.rel (0) target = $region9
  $region8: #{lstm_forward.1} parent=0 // pred_region
    _
  $region9: #{lstm_forward.1} parent=0 // pred_fallthru
    _
  // Predicated region
  $region10: #{lstm_forward.1} parent=0 // pred_check
    _
  $region11: #{lstm_forward.1} parent=0 // pred_check_branch
    %16 = sbr.rel (0) target = $region13
  $region12: #{lstm_forward.1} parent=0 // pred_region
    _
  $region13: #{lstm_forward.1} parent=0 // pred_fallthru
    _
  // Predicated region
  $region14: #{lstm_forward.1} parent=0 // pred_check
    _
  $region15: #{lstm_forward.1} parent=0 // pred_check_branch
    %18 = sbr.rel (0) target = $region17
  $region16: #{lstm_forward.1} parent=0 // pred_region
    _
  $region17: #{lstm_forward.1} parent=0 // pred_fallthru
    _
  // Predicated region
  $region18: #{lstm_forward.1} parent=0 // pred_check
    _
  $region19: #{lstm_forward.1} parent=0 // pred_check_branch
    %20 = sbr.rel (0) target = $region21
  $region20: #{lstm_forward.1} parent=0 // pred_region
    _
  $region21: #{lstm_forward.1} parent=0 // pred_fallthru
    _
  // Predicated region
  $region22: #{lstm_forward.1} parent=0 // pred_check
    _
  $region23: #{lstm_forward.1} parent=0 // pred_check_branch
    %22 = sbr.rel (0) target = $region25
  $region24: #{lstm_forward.1} parent=0 // pred_region
    _
  $region25: #{lstm_forward.1} parent=0 // pred_fallthru
    _
  %v23 = vld [vmem:[%s0] sm:$0xff]
  %v24 = vld [vmem:[%s0 + $0x8] sm:$0xff]
  %v25 = vld [vmem:[%s0 + $0x10] sm:$0xff]
  %v26 = vld [vmem:[%s0 + $0x18] sm:$0xff]
  %v27 = vld [vmem:[%s0 + $0x20] sm:$0xff]
  %v28 = vld [vmem:[%s0 + $0x28] sm:$0xff]
  %v29 = vld [vmem:[%s0 + $0x30] sm:$0xff]
  %v30 = vld [vmem:[%s0 + $0x38] sm:$0xff]
  %v31 = vld [vmem:[%s1] sm:$0xff]
  %v32 = vld [vmem:[%s1 + $0x8] sm:$0xf]
  %v33 = vld [vmem:[%s3] sm:$0x1]
  %v35 = vperm.slane %v33, 0
  %vm37 = vcmask 97280
  %v39 = vsel %vm37, %v23, 0
  %v42 = vsel %vm37, %v24, 0
  %v45 = vsel %vm37, %v25, 0
  %v48 = vsel %vm37, %v26, 0
  %v51 = vsel %vm37, %v27, 0
  %v54 = vsel %vm37, %v28, 0
  %v57 = vsel %vm37, %v29, 0
  %v60 = vsel %vm37, %v30, 0
  %vm62 = vcmask 1043456
  %v64 = vsel %vm62, %v32, 0
  %66 = vmatpush.msra.mxu0 0.0
  %67 = vmatpush.msra.mxu0 0.0
  %68 = vmatpush.msra.mxu0 0.0
  %69 = vmatpush.msra.mxu0 0.0
  %70 = vmatpush.msra.mxu0 0.0
  %71 = vmatpush.msra.mxu0 0.0
  %72 = vmatpush.msra.mxu0 0.0
  %73 = vmatpush.msra.mxu0 0.0
  %74 = vmatpush.msra.mxu0 0.0
  %75 = vmatpush.msra.mxu0 0.0
  %76 = vmatpush.msra.mxu0 0.0
  %77 = vmatpush.msra.mxu0 0.0
  %78 = vmatpush.msra.mxu0 0.0
  %79 = vmatpush.msra.mxu0 0.0
  %80 = vmatpush.msra.mxu0 %v64
  %81 = vmatpush.msra.mxu0 %v31
  %82 = vmatmul.f32.gmra.mxu0 %v39
  %v83 = vpop.f32.mrf.mxu0
  %v84 = vadd.f32 %v35, %v83
  %85 = vmatmul.f32.gmra.mxu0 %v42
  %v86 = vpop.f32.mrf.mxu0
  %v87 = vadd.f32 %v35, %v86
  %88 = vmatmul.f32.gmra.mxu0 %v45
  %v89 = vpop.f32.mrf.mxu0
  %v90 = vadd.f32 %v35, %v89
  %91 = vmatmul.f32.gmra.mxu0 %v48
  %v92 = vpop.f32.mrf.mxu0
  %v93 = vadd.f32 %v35, %v92
  %94 = vmatmul.f32.gmra.mxu0 %v51
  %v95 = vpop.f32.mrf.mxu0
  %v96 = vadd.f32 %v35, %v95
  %97 = vmatmul.f32.gmra.mxu0 %v54
  %v98 = vpop.f32.mrf.mxu0
  %v99 = vadd.f32 %v35, %v98
  %100 = vmatmul.f32.gmra.mxu0 %v57
  %v101 = vpop.f32.mrf.mxu0
  %v102 = vadd.f32 %v35, %v101
  %103 = vmatmul.f32.gmra.mxu0 %v60
  %v104 = vpop.f32.mrf.mxu0
  %v105 = vadd.f32 %v35, %v104
  %106 = vdwg.mxu0
  %v107 = vld [vmem:[%s2] sm:$0xff]
  %v108 = vld [vmem:[%s2 + $0x8] sm:$0xff]
  %v109 = vld [vmem:[%s2 + $0x10] sm:$0xff]
  %v110 = vld [vmem:[%s2 + $0x18] sm:$0xff]
  %vm111 = vcmask 261120
  %v113 = vsel %vm111, 0.0, 0
  %115 = vmatpush.msra.mxu0 0.0
  %116 = vmatpush.msra.mxu0 0.0
  %117 = vmatpush.msra.mxu0 0.0
  %118 = vmatpush.msra.mxu0 0.0
  %119 = vmatpush.msra.mxu0 0.0
  %120 = vmatpush.msra.mxu0 0.0
  %121 = vmatpush.msra.mxu0 0.0
  %122 = vmatpush.msra.mxu0 0.0
  %123 = vmatpush.msra.mxu0 0.0
  %124 = vmatpush.msra.mxu0 0.0
  %125 = vmatpush.msra.mxu0 0.0
  %126 = vmatpush.msra.mxu0 0.0
  %127 = vmatpush.msra.mxu0 %v110
  %128 = vmatpush.msra.mxu0 %v109
  %129 = vmatpush.msra.mxu0 %v108
  %130 = vmatpush.msra.mxu0 %v107
  %131 = vmatmul.f32.gmra.mxu0 %v113
  %v132 = vpop.f32.mrf.mxu0
  %v133 = vadd.f32 0.0, %v132
  %134 = vdwg.mxu0
  %v135 = vadd.f32 %v84, %v133
  %v136 = vxor.u32 %v135, 2147483648
  %v137 = vmul.f32 %v136, 1.442695
  %v138 = vpow.pop %v137
  %v139 = vadd.f32 %v138, 1.0
  %v140 = vrcp.pop %v139
  %v141 = vmul.f32 %v139, %v140
  %v142 = vsub.f32 1.0, %v141
  %v143 = vmul.f32 %v140, %v142
  %v144 = vadd.f32 %v140, %v143
  %vm145 = vweird.f32 %v139
  %vm146 = vweird.f32 %v140
  %vm147 = vmor %vm145, %vm146
  %v148 = vsel %vm147, %v140, %v144
  %v149 = vand.u32 2147483647, %v139
  %vm150 = vcmp.eq.f32.partialorder %v149, 8.507059e+37
  %v151 = vand.u32 %v139, 2147483648
  %v152 = vor.u32 1.1754944e-38, %v151
  %v153 = vsel %vm150, %v152, %v148
  %v154 = vmul.f32 1.0, %v153
  %v155 = vtanh.pop %v135
  %v156 = vmul.f32 %v154, 0.0
  %158 = vrot.lane.b32.xlu0 %v155, 32
  %v159 = vpop.permute.xlu0 %158
  %v161 = vmul.f32 %v154, %v159
  %163 = vrot.lane.b32.xlu0 %v161, 32
  %v164 = vpop.permute.xlu0 %163
  %v166 = vadd.f32 %v156, %v164
  %v167 = vtanh.pop %v166
  %169 = vrot.lane.b32.xlu0 %v167, 32
  %v170 = vpop.permute.xlu0 %169
  %v172 = vmul.f32 %v154, %v170
  %174 = vrot.lane.b32.xlu0 %v172, 64
  %v175 = vpop.permute.xlu0 %174
  %177 = vst.msk [vmem:[#allocation2] sm:$0xff] %vm111, %v175
  %v178 = vsel %vm111, %v175, 0
  %180 = vmatpush.msra.mxu0 0.0
  %181 = vmatpush.msra.mxu0 0.0
  %182 = vmatpush.msra.mxu0 0.0
  %183 = vmatpush.msra.mxu0 0.0
  %184 = vmatpush.msra.mxu0 0.0
  %185 = vmatpush.msra.mxu0 0.0
  %186 = vmatpush.msra.mxu0 0.0
  %187 = vmatpush.msra.mxu0 0.0
  %188 = vmatpush.msra.mxu0 0.0
  %189 = vmatpush.msra.mxu0 0.0
  %190 = vmatpush.msra.mxu0 0.0
  %191 = vmatpush.msra.mxu0 0.0
  %192 = vmatpush.msra.mxu0 %v110
  %193 = vmatpush.msra.mxu0 %v109
  %194 = vmatpush.msra.mxu0 %v108
  %195 = vmatpush.msra.mxu0 %v107
  %196 = vmatmul.f32.gmra.mxu0 %v178
  %v197 = vpop.f32.mrf.mxu0
  %v198 = vadd.f32 0.0, %v197
  %199 = vdwg.mxu0
  %v200 = vadd.f32 %v87, %v198
  %v201 = vxor.u32 %v200, 2147483648
  %v202 = vmul.f32 %v201, 1.442695
  %v203 = vpow.pop %v202
  %v204 = vadd.f32 %v203, 1.0
  %v205 = vrcp.pop %v204
  %v206 = vmul.f32 %v204, %v205
  %v207 = vsub.f32 1.0, %v206
  %v208 = vmul.f32 %v205, %v207
  %v209 = vadd.f32 %v205, %v208
  %vm210 = vweird.f32 %v204
  %vm211 = vweird.f32 %v205
  %vm212 = vmor %vm210, %vm211
  %v213 = vsel %vm212, %v205, %v209
  %v214 = vand.u32 2147483647, %v204
  %vm215 = vcmp.eq.f32.partialorder %v214, 8.507059e+37
  %v216 = vand.u32 %v204, 2147483648
  %v217 = vor.u32 1.1754944e-38, %v216
  %v218 = vsel %vm215, %v217, %v213
  %v219 = vmul.f32 1.0, %v218
  %v220 = vtanh.pop %v200
  %v221 = vmul.f32 %v219, %v166
  %223 = vrot.lane.b32.xlu0 %v220, 32
  %v224 = vpop.permute.xlu0 %223
  %v226 = vmul.f32 %v219, %v224
  %228 = vrot.lane.b32.xlu0 %v226, 32
  %v229 = vpop.permute.xlu0 %228
  %v231 = vadd.f32 %v221, %v229
  %v232 = vtanh.pop %v231
  %234 = vrot.lane.b32.xlu0 %v232, 32
  %v235 = vpop.permute.xlu0 %234
  %v237 = vmul.f32 %v219, %v235
  %239 = vrot.lane.b32.xlu0 %v237, 96
  %v240 = vpop.permute.xlu0 %239
  %vm242 = vcmask 523520
  %243 = vst.msk [vmem:[#allocation2] sm:$0xff] %vm242, %v240
  %244 = vrot.lane.b32.xlu0 %v237, 64
  %v245 = vpop.permute.xlu0 %244
  %v246 = vsel %vm111, %v245, 0
  %248 = vmatpush.msra.mxu0 0.0
  %249 = vmatpush.msra.mxu0 0.0
  %250 = vmatpush.msra.mxu0 0.0
  %251 = vmatpush.msra.mxu0 0.0
  %252 = vmatpush.msra.mxu0 0.0
  %253 = vmatpush.msra.mxu0 0.0
  %254 = vmatpush.msra.mxu0 0.0
  %255 = vmatpush.msra.mxu0 0.0
  %256 = vmatpush.msra.mxu0 0.0
  %257 = vmatpush.msra.mxu0 0.0
  %258 = vmatpush.msra.mxu0 0.0
  %259 = vmatpush.msra.mxu0 0.0
  %260 = vmatpush.msra.mxu0 %v110
  %261 = vmatpush.msra.mxu0 %v109
  %262 = vmatpush.msra.mxu0 %v108
  %263 = vmatpush.msra.mxu0 %v107
  %264 = vmatmul.f32.gmra.mxu0 %v246
  %v265 = vpop.f32.mrf.mxu0
  %v266 = vadd.f32 0.0, %v265
  %267 = vdwg.mxu0
  %v268 = vadd.f32 %v90, %v266
  %v269 = vxor.u32 %v268, 2147483648
  %v270 = vmul.f32 %v269, 1.442695
  %v271 = vpow.pop %v270
  %v272 = vadd.f32 %v271, 1.0
  %v273 = vrcp.pop %v272
  %v274 = vmul.f32 %v272, %v273
  %v275 = vsub.f32 1.0, %v274
  %v276 = vmul.f32 %v273, %v275
  %v277 = vadd.f32 %v273, %v276
  %vm278 = vweird.f32 %v272
  %vm279 = vweird.f32 %v273
  %vm280 = vmor %vm278, %vm279
  %v281 = vsel %vm280, %v273, %v277
  %v282 = vand.u32 2147483647, %v272
  %vm283 = vcmp.eq.f32.partialorder %v282, 8.507059e+37
  %v284 = vand.u32 %v272, 2147483648
  %v285 = vor.u32 1.1754944e-38, %v284
  %v286 = vsel %vm283, %v285, %v281
  %v287 = vmul.f32 1.0, %v286
  %v288 = vtanh.pop %v268
  %v289 = vmul.f32 %v287, %v231
  %291 = vrot.lane.b32.xlu0 %v288, 32
  %v292 = vpop.permute.xlu0 %291
  %v294 = vmul.f32 %v287, %v292
  %296 = vrot.lane.b32.xlu0 %v294, 32
  %v297 = vpop.permute.xlu0 %296
  %v299 = vadd.f32 %v289, %v297
  %v300 = vtanh.pop %v299
  %302 = vrot.lane.b32.xlu0 %v300, 32
  %v303 = vpop.permute.xlu0 %302
  %v305 = vmul.f32 %v287, %v303
  %vm306 = vcmask 785920
  %307 = vst.msk [vmem:[#allocation2] sm:$0xff] %vm306, %v305
  %309 = vrot.lane.b32.xlu0 %v305, 64
  %v310 = vpop.permute.xlu0 %309
  %v311 = vsel %vm111, %v310, 0
  %313 = vmatpush.msra.mxu0 0.0
  %314 = vmatpush.msra.mxu0 0.0
  %315 = vmatpush.msra.mxu0 0.0
  %316 = vmatpush.msra.mxu0 0.0
  %317 = vmatpush.msra.mxu0 0.0
  %318 = vmatpush.msra.mxu0 0.0
  %319 = vmatpush.msra.mxu0 0.0
  %320 = vmatpush.msra.mxu0 0.0
  %321 = vmatpush.msra.mxu0 0.0
  %322 = vmatpush.msra.mxu0 0.0
  %323 = vmatpush.msra.mxu0 0.0
  %324 = vmatpush.msra.mxu0 0.0
  %325 = vmatpush.msra.mxu0 %v110
  %326 = vmatpush.msra.mxu0 %v109
  %327 = vmatpush.msra.mxu0 %v108
  %328 = vmatpush.msra.mxu0 %v107
  %329 = vmatmul.f32.gmra.mxu0 %v311
  %v330 = vpop.f32.mrf.mxu0
  %v331 = vadd.f32 0.0, %v330
  %332 = vdwg.mxu0
  %v333 = vadd.f32 %v93, %v331
  %v334 = vxor.u32 %v333, 2147483648
  %v335 = vmul.f32 %v334, 1.442695
  %v336 = vpow.pop %v335
  %v337 = vadd.f32 %v336, 1.0
  %v338 = vrcp.pop %v337
  %v339 = vmul.f32 %v337, %v338
  %v340 = vsub.f32 1.0, %v339
  %v341 = vmul.f32 %v338, %v340
  %v342 = vadd.f32 %v338, %v341
  %vm343 = vweird.f32 %v337
  %vm344 = vweird.f32 %v338
  %vm345 = vmor %vm343, %vm344
  %v346 = vsel %vm345, %v338, %v342
  %v347 = vand.u32 2147483647, %v337
  %vm348 = vcmp.eq.f32.partialorder %v347, 8.507059e+37
  %v349 = vand.u32 %v337, 2147483648
  %v350 = vor.u32 1.1754944e-38, %v349
  %v351 = vsel %vm348, %v350, %v346
  %v352 = vmul.f32 1.0, %v351
  %v353 = vtanh.pop %v333
  %v354 = vmul.f32 %v352, %v299
  %356 = vrot.lane.b32.xlu0 %v353, 32
  %v357 = vpop.permute.xlu0 %356
  %v359 = vmul.f32 %v352, %v357
  %361 = vrot.lane.b32.xlu0 %v359, 32
  %v362 = vpop.permute.xlu0 %361
  %v364 = vadd.f32 %v354, %v362
  %v365 = vtanh.pop %v364
  %367 = vrot.lane.b32.xlu0 %v365, 32
  %v368 = vpop.permute.xlu0 %367
  %v370 = vmul.f32 %v352, %v368
  %372 = vrot.lane.b32.xlu0 %v370, 32
  %v373 = vpop.permute.xlu0 %372
  %vm375 = vcmask 1048320
  %376 = vst.msk [vmem:[#allocation2] sm:$0xff] %vm375, %v373
  %377 = vrot.lane.b32.xlu0 %v370, 64
  %v378 = vpop.permute.xlu0 %377
  %v379 = vsel %vm111, %v378, 0
  %381 = vmatpush.msra.mxu0 0.0
  %382 = vmatpush.msra.mxu0 0.0
  %383 = vmatpush.msra.mxu0 0.0
  %384 = vmatpush.msra.mxu0 0.0
  %385 = vmatpush.msra.mxu0 0.0
  %386 = vmatpush.msra.mxu0 0.0
  %387 = vmatpush.msra.mxu0 0.0
  %388 = vmatpush.msra.mxu0 0.0
  %389 = vmatpush.msra.mxu0 0.0
  %390 = vmatpush.msra.mxu0 0.0
  %391 = vmatpush.msra.mxu0 0.0
  %392 = vmatpush.msra.mxu0 0.0
  %393 = vmatpush.msra.mxu0 %v110
  %394 = vmatpush.msra.mxu0 %v109
  %395 = vmatpush.msra.mxu0 %v108
  %396 = vmatpush.msra.mxu0 %v107
  %397 = vmatmul.f32.gmra.mxu0 %v379
  %v398 = vpop.f32.mrf.mxu0
  %v399 = vadd.f32 0.0, %v398
  %400 = vdwg.mxu0
  %v401 = vadd.f32 %v96, %v399
  %v402 = vxor.u32 %v401, 2147483648
  %v403 = vmul.f32 %v402, 1.442695
  %v404 = vpow.pop %v403
  %v405 = vadd.f32 %v404, 1.0
  %v406 = vrcp.pop %v405
  %v407 = vmul.f32 %v405, %v406
  %v408 = vsub.f32 1.0, %v407
  %v409 = vmul.f32 %v406, %v408
  %v410 = vadd.f32 %v406, %v409
  %vm411 = vweird.f32 %v405
  %vm412 = vweird.f32 %v406
  %vm413 = vmor %vm411, %vm412
  %v414 = vsel %vm413, %v406, %v410
  %v415 = vand.u32 2147483647, %v405
  %vm416 = vcmp.eq.f32.partialorder %v415, 8.507059e+37
  %v417 = vand.u32 %v405, 2147483648
  %v418 = vor.u32 1.1754944e-38, %v417
  %v419 = vsel %vm416, %v418, %v414
  %v420 = vmul.f32 1.0, %v419
  %v421 = vtanh.pop %v401
  %v422 = vmul.f32 %v420, %v364
  %424 = vrot.lane.b32.xlu0 %v421, 32
  %v425 = vpop.permute.xlu0 %424
  %v427 = vmul.f32 %v420, %v425
  %429 = vrot.lane.b32.xlu0 %v427, 32
  %v430 = vpop.permute.xlu0 %429
  %v432 = vadd.f32 %v422, %v430
  %v433 = vtanh.pop %v432
  %435 = vrot.lane.b32.xlu0 %v433, 32
  %v436 = vpop.permute.xlu0 %435
  %v438 = vmul.f32 %v420, %v436
  %440 = vrot.lane.b32.xlu0 %v438, 64
  %v441 = vpop.permute.xlu0 %440
  %443 = vst.msk [vmem:[#allocation2 + $0x8] sm:$0xff] %vm111, %v441
  %v444 = vsel %vm111, %v441, 0
  %446 = vmatpush.msra.mxu0 0.0
  %447 = vmatpush.msra.mxu0 0.0
  %448 = vmatpush.msra.mxu0 0.0
  %449 = vmatpush.msra.mxu0 0.0
  %450 = vmatpush.msra.mxu0 0.0
  %451 = vmatpush.msra.mxu0 0.0
  %452 = vmatpush.msra.mxu0 0.0
  %453 = vmatpush.msra.mxu0 0.0
  %454 = vmatpush.msra.mxu0 0.0
  %455 = vmatpush.msra.mxu0 0.0
  %456 = vmatpush.msra.mxu0 0.0
  %457 = vmatpush.msra.mxu0 0.0
  %458 = vmatpush.msra.mxu0 %v110
  %459 = vmatpush.msra.mxu0 %v109
  %460 = vmatpush.msra.mxu0 %v108
  %461 = vmatpush.msra.mxu0 %v107
  %462 = vmatmul.f32.gmra.mxu0 %v444
  %v463 = vpop.f32.mrf.mxu0
  %v464 = vadd.f32 0.0, %v463
  %465 = vdwg.mxu0
  %v466 = vadd.f32 %v99, %v464
  %v467 = vxor.u32 %v466, 2147483648
  %v468 = vmul.f32 %v467, 1.442695
  %v469 = vpow.pop %v468
  %v470 = vadd.f32 %v469, 1.0
  %v471 = vrcp.pop %v470
  %v472 = vmul.f32 %v470, %v471
  %v473 = vsub.f32 1.0, %v472
  %v474 = vmul.f32 %v471, %v473
  %v475 = vadd.f32 %v471, %v474
  %vm476 = vweird.f32 %v470
  %vm477 = vweird.f32 %v471
  %vm478 = vmor %vm476, %vm477
  %v479 = vsel %vm478, %v471, %v475
  %v480 = vand.u32 2147483647, %v470
  %vm481 = vcmp.eq.f32.partialorder %v480, 8.507059e+37
  %v482 = vand.u32 %v470, 2147483648
  %v483 = vor.u32 1.1754944e-38, %v482
  %v484 = vsel %vm481, %v483, %v479
  %v485 = vmul.f32 1.0, %v484
  %v486 = vtanh.pop %v466
  %v487 = vmul.f32 %v485, %v432
  %489 = vrot.lane.b32.xlu0 %v486, 32
  %v490 = vpop.permute.xlu0 %489
  %v492 = vmul.f32 %v485, %v490
  %494 = vrot.lane.b32.xlu0 %v492, 32
  %v495 = vpop.permute.xlu0 %494
  %v497 = vadd.f32 %v487, %v495
  %v498 = vtanh.pop %v497
  %500 = vrot.lane.b32.xlu0 %v498, 32
  %v501 = vpop.permute.xlu0 %500
  %v503 = vmul.f32 %v485, %v501
  %505 = vrot.lane.b32.xlu0 %v503, 96
  %v506 = vpop.permute.xlu0 %505
  %508 = vst.msk [vmem:[#allocation2 + $0x8] sm:$0xff] %vm242, %v506
  %509 = vrot.lane.b32.xlu0 %v503, 64
  %v510 = vpop.permute.xlu0 %509
  %v511 = vsel %vm111, %v510, 0
  %513 = vmatpush.msra.mxu0 0.0
  %514 = vmatpush.msra.mxu0 0.0
  %515 = vmatpush.msra.mxu0 0.0
  %516 = vmatpush.msra.mxu0 0.0
  %517 = vmatpush.msra.mxu0 0.0
  %518 = vmatpush.msra.mxu0 0.0
  %519 = vmatpush.msra.mxu0 0.0
  %520 = vmatpush.msra.mxu0 0.0
  %521 = vmatpush.msra.mxu0 0.0
  %522 = vmatpush.msra.mxu0 0.0
  %523 = vmatpush.msra.mxu0 0.0
  %524 = vmatpush.msra.mxu0 0.0
  %525 = vmatpush.msra.mxu0 %v110
  %526 = vmatpush.msra.mxu0 %v109
  %527 = vmatpush.msra.mxu0 %v108
  %528 = vmatpush.msra.mxu0 %v107
  %529 = vmatmul.f32.gmra.mxu0 %v511
  %v530 = vpop.f32.mrf.mxu0
  %v531 = vadd.f32 0.0, %v530
  %532 = vdwg.mxu0
  %v533 = vadd.f32 %v102, %v531
  %v534 = vxor.u32 %v533, 2147483648
  %v535 = vmul.f32 %v534, 1.442695
  %v536 = vpow.pop %v535
  %v537 = vadd.f32 %v536, 1.0
  %v538 = vrcp.pop %v537
  %v539 = vmul.f32 %v537, %v538
  %v540 = vsub.f32 1.0, %v539
  %v541 = vmul.f32 %v538, %v540
  %v542 = vadd.f32 %v538, %v541
  %vm543 = vweird.f32 %v537
  %vm544 = vweird.f32 %v538
  %vm545 = vmor %vm543, %vm544
  %v546 = vsel %vm545, %v538, %v542
  %v547 = vand.u32 2147483647, %v537
  %vm548 = vcmp.eq.f32.partialorder %v547, 8.507059e+37
  %v549 = vand.u32 %v537, 2147483648
  %v550 = vor.u32 1.1754944e-38, %v549
  %v551 = vsel %vm548, %v550, %v546
  %v552 = vmul.f32 1.0, %v551
  %v553 = vtanh.pop %v533
  %v554 = vmul.f32 %v552, %v497
  %556 = vrot.lane.b32.xlu0 %v553, 32
  %v557 = vpop.permute.xlu0 %556
  %v559 = vmul.f32 %v552, %v557
  %561 = vrot.lane.b32.xlu0 %v559, 32
  %v562 = vpop.permute.xlu0 %561
  %v564 = vadd.f32 %v554, %v562
  %v565 = vtanh.pop %v564
  %567 = vrot.lane.b32.xlu0 %v565, 32
  %v568 = vpop.permute.xlu0 %567
  %v570 = vmul.f32 %v552, %v568
  %571 = vst.msk [vmem:[#allocation2 + $0x8] sm:$0xff] %vm306, %v570
  %573 = vrot.lane.b32.xlu0 %v570, 64
  %v574 = vpop.permute.xlu0 %573
  %v575 = vsel %vm111, %v574, 0
  %577 = vmatpush.msra.mxu0 0.0
  %578 = vmatpush.msra.mxu0 0.0
  %579 = vmatpush.msra.mxu0 0.0
  %580 = vmatpush.msra.mxu0 0.0
  %581 = vmatpush.msra.mxu0 0.0
  %582 = vmatpush.msra.mxu0 0.0
  %583 = vmatpush.msra.mxu0 0.0
  %584 = vmatpush.msra.mxu0 0.0
  %585 = vmatpush.msra.mxu0 0.0
  %586 = vmatpush.msra.mxu0 0.0
  %587 = vmatpush.msra.mxu0 0.0
  %588 = vmatpush.msra.mxu0 0.0
  %589 = vmatpush.msra.mxu0 %v110
  %590 = vmatpush.msra.mxu0 %v109
  %591 = vmatpush.msra.mxu0 %v108
  %592 = vmatpush.msra.mxu0 %v107
  %593 = vmatmul.f32.gmra.mxu0 %v575
  %v594 = vpop.f32.mrf.mxu0
  %v595 = vadd.f32 0.0, %v594
  %596 = vdwg.mxu0
  %v597 = vadd.f32 %v105, %v595
  %v598 = vxor.u32 %v597, 2147483648
  %v599 = vmul.f32 %v598, 1.442695
  %v600 = vpow.pop %v599
  %v601 = vadd.f32 %v600, 1.0
  %v602 = vrcp.pop %v601
  %v603 = vmul.f32 %v601, %v602
  %v604 = vsub.f32 1.0, %v603
  %v605 = vmul.f32 %v602, %v604
  %v606 = vadd.f32 %v602, %v605
  %vm607 = vweird.f32 %v601
  %vm608 = vweird.f32 %v602
  %vm609 = vmor %vm607, %vm608
  %v610 = vsel %vm609, %v602, %v606
  %v611 = vand.u32 2147483647, %v601
  %vm612 = vcmp.eq.f32.partialorder %v611, 8.507059e+37
  %v613 = vand.u32 %v601, 2147483648
  %v614 = vor.u32 1.1754944e-38, %v613
  %v615 = vsel %vm612, %v614, %v610
  %v616 = vmul.f32 1.0, %v615
  %v617 = vtanh.pop %v597
  %v618 = vmul.f32 %v616, %v564
  %620 = vrot.lane.b32.xlu0 %v617, 32
  %v621 = vpop.permute.xlu0 %620
  %v623 = vmul.f32 %v616, %v621
  %625 = vrot.lane.b32.xlu0 %v623, 32
  %v626 = vpop.permute.xlu0 %625
  %v628 = vadd.f32 %v618, %v626
  %v629 = vtanh.pop %v628
  %631 = vrot.lane.b32.xlu0 %v629, 32
  %v632 = vpop.permute.xlu0 %631
  %v634 = vmul.f32 %v616, %v632
  %636 = vrot.lane.b32.xlu0 %v634, 32
  %v637 = vpop.permute.xlu0 %636
  %639 = vst.msk [vmem:[#allocation2 + $0x8] sm:$0xff] %vm375, %v637
  %v640 = vld [vmem:[#allocation2] sm:$0xff]
  %v641 = vld [vmem:[#allocation2 + $0x8] sm:$0xff]
  %v642 = vld [vmem:[%s4] sm:$0xff]
  %v643 = vld [vmem:[%s4 + $0x8] sm:$0xff]
  %v644 = vld [vmem:[%s4 + $0x10] sm:$0xff]
  %v645 = vld [vmem:[%s4 + $0x18] sm:$0xff]
  %v646 = vld [vmem:[%s4 + $0x20] sm:$0xff]
  %v647 = vld [vmem:[%s4 + $0x28] sm:$0xff]
  %v648 = vld [vmem:[%s4 + $0x30] sm:$0xff]
  %v649 = vld [vmem:[%s4 + $0x38] sm:$0xff]
  %v650 = vld [vmem:[%s4 + $0x40] sm:$0xff]
  %v651 = vld [vmem:[%s4 + $0x48] sm:$0xff]
  %v652 = vld [vmem:[%s4 + $0x50] sm:$0xff]
  %v653 = vld [vmem:[%s4 + $0x58] sm:$0xff]
  %v654 = vld [vmem:[%s4 + $0x60] sm:$0xff]
  %v655 = vld [vmem:[%s4 + $0x68] sm:$0xff]
  %v656 = vld [vmem:[%s4 + $0x70] sm:$0xff]
  %v657 = vld [vmem:[%s4 + $0x78] sm:$0xff]
  %v658 = vld [vmem:[%s4 + $0x80] sm:$0xff]
  %v659 = vld [vmem:[%s4 + $0x88] sm:$0xff]
  %v660 = vld [vmem:[%s4 + $0x90] sm:$0xff]
  %v661 = vld [vmem:[%s4 + $0x98] sm:$0xff]
  %v662 = vld [vmem:[%s4 + $0xa0] sm:$0xff]
  %v663 = vld [vmem:[%s4 + $0xa8] sm:$0xff]
  %v664 = vld [vmem:[%s4 + $0xb0] sm:$0xff]
  %v665 = vld [vmem:[%s4 + $0xb8] sm:$0xff]
  %v666 = vld [vmem:[%s4 + $0xc0] sm:$0xff]
  %v667 = vld [vmem:[%s4 + $0xc8] sm:$0xff]
  %v668 = vld [vmem:[%s4 + $0xd0] sm:$0xff]
  %v669 = vld [vmem:[%s4 + $0xd8] sm:$0xff]
  %v670 = vld [vmem:[%s4 + $0xe0] sm:$0xff]
  %v671 = vld [vmem:[%s4 + $0xe8] sm:$0xff]
  %v672 = vld [vmem:[%s4 + $0xf0] sm:$0xff]
  %v673 = vld [vmem:[%s4 + $0xf8] sm:$0xff]
  %v674 = vld [vmem:[%s5] sm:$0x1]
  %v676 = vperm.slane %v674, 0
  %678 = vmatpush.msra.mxu0 %v657
  %679 = vmatpush.msra.mxu0 %v656
  %680 = vmatpush.msra.mxu0 %v655
  %681 = vmatpush.msra.mxu0 %v654
  %682 = vmatpush.msra.mxu0 %v653
  %683 = vmatpush.msra.mxu0 %v652
  %684 = vmatpush.msra.mxu0 %v651
  %685 = vmatpush.msra.mxu0 %v650
  %686 = vmatpush.msra.mxu0 %v649
  %687 = vmatpush.msra.mxu0 %v648
  %688 = vmatpush.msra.mxu0 %v647
  %689 = vmatpush.msra.mxu0 %v646
  %690 = vmatpush.msra.mxu0 %v645
  %691 = vmatpush.msra.mxu0 %v644
  %692 = vmatpush.msra.mxu0 %v643
  %693 = vmatpush.msra.mxu0 %v642
  %694 = vmatmul.f32.gmra.mxu0 %v640
  %v695 = vpop.f32.mrf.mxu0
  %v696 = vadd.f32 %v676, %v695
  %697 = vdwg.mxu0
  %698 = vmatpush.msra.mxu0 %v673
  %699 = vmatpush.msra.mxu0 %v672
  %700 = vmatpush.msra.mxu0 %v671
  %701 = vmatpush.msra.mxu0 %v670
  %702 = vmatpush.msra.mxu0 %v669
  %703 = vmatpush.msra.mxu0 %v668
  %704 = vmatpush.msra.mxu0 %v667
  %705 = vmatpush.msra.mxu0 %v666
  %706 = vmatpush.msra.mxu0 %v665
  %707 = vmatpush.msra.mxu0 %v664
  %708 = vmatpush.msra.mxu0 %v663
  %709 = vmatpush.msra.mxu0 %v662
  %710 = vmatpush.msra.mxu0 %v661
  %711 = vmatpush.msra.mxu0 %v660
  %712 = vmatpush.msra.mxu0 %v659
  %713 = vmatpush.msra.mxu0 %v658
  %714 = vmatmul.f32.gmra.mxu0 %v641
  %v715 = vpop.f32.mrf.mxu0
  %v716 = vadd.f32 %v696, %v715
  %717 = vdwg.mxu0
  %vm718 = vcmask 39936
  %719 = vst.msk [vmem:[%s6] sm:$0xff] %vm718, %v716
  // Predicated region
  $region26: #{lstm_forward.1} parent=0 // pred_check
    _
  $region27: #{lstm_forward.1} parent=0 // pred_check_branch
    %721 = sbr.rel (0) target = $region29
  $region28: #{lstm_forward.1} parent=0 // pred_region
    _
  $region29: #{lstm_forward.1} parent=0 // pred_fallthru
    _
  // Predicated region
  $region30: #{lstm_forward.1} parent=0 // pred_check
    _
  $region31: #{lstm_forward.1} parent=0 // pred_check_branch
    %723 = sbr.rel (0) target = $region33
  $region32: #{lstm_forward.1} parent=0 // pred_region
    _
  $region33: #{lstm_forward.1} parent=0 // pred_fallthru
    _

</llo_original>
